<compile_context>
chip_gen: v7x
topology: tpu7x:2x2x1
jax: 0.10.0
libtpu: 0.0.40
codegen_flags: <defaults>
</compile_context>

<pallas_src>
import functools

import jax
import jax.numpy as jnp
from jax.experimental import pallas as pl
from jax.experimental.pallas import tpu as pltpu

block_size = 128     # max sequence length (size of the causal tril buffer)
n_embd = 384
head_size = 64


def _head_kernel(x_ref, wqkv_ref, o_ref, *, scale, hs):
    # x_ref:    (Bt, T, C) VMEM tile (Bt batch elements per grid step)
    # wqkv_ref: (C, 3H)    fused QKV weights (bf16, resident every step)
    # o_ref:    (Bt, T, H)
    x = x_ref[...].astype(jnp.bfloat16)       # (Bt, T, C)
    w = wqkv_ref[...]                          # (C, 3H), already bf16

    # Fused QKV projection on the MXU, f32 accumulation.
    qkv = jnp.einsum('btc,ch->bth', x, w,
                     preferred_element_type=jnp.float32)   # (Bt, T, 3H) f32

    q = qkv[:, :, 0 * hs:1 * hs] * scale       # fold scale into q (T,H) tile
    k = qkv[:, :, 1 * hs:2 * hs]
    v = qkv[:, :, 2 * hs:3 * hs]

    # Attention scores: contract head axis directly (no k.T materialisation).
    wei = jnp.einsum('bqh,bkh->bqk',
                     q.astype(jnp.bfloat16), k.astype(jnp.bfloat16),
                     preferred_element_type=jnp.float32)   # (Bt, T, T) f32

    # Causal mask (tril): positions where col > row get -inf.
    T = wei.shape[-1]
    row = jax.lax.broadcasted_iota(jnp.int32, (T, T), 0)
    col = jax.lax.broadcasted_iota(jnp.int32, (T, T), 1)
    wei = jnp.where((col <= row)[None, :, :], wei, -jnp.inf)

    # Numerically-stable softmax over the last axis (f32).
    wei = wei - jnp.max(wei, axis=-1, keepdims=True)
    p = jnp.exp(wei)
    p = p * pl.reciprocal(jnp.sum(p, axis=-1, keepdims=True), approx=True)

    # Dropout: identity (eval mode).

    # Weighted sum of values.
    out = jnp.einsum('bqk,bkh->bqh',
                     p.astype(jnp.bfloat16), v.astype(jnp.bfloat16),
                     preferred_element_type=jnp.float32)   # (Bt, T, H) f32
    o_ref[...] = out.astype(o_ref.dtype)


def _pick_block_b(B, target):
    """Largest divisor of B that is <= target, keeping >= 2 grid steps
    whenever possible (so both v7x TensorCores get work)."""
    best = 1
    for bt in range(1, B + 1):
        if bt > target:
            break
        if B % bt:
            continue
        if (B // bt) >= 2 or B == 1:
            best = bt
    return best


def head_forward(x, wq, wk, wv, *, block_b=8):
    """x: (B, T, C) float32; w*: (C, H) float32 (pre-transposed Linear weights)."""
    B, T, C = x.shape
    H = wq.shape[1]
    scale = float(H) ** -0.5

    # Fuse the three projection weights into one (C, 3H) bf16 matrix.
    wqkv = jnp.concatenate([wq, wk, wv], axis=1).astype(jnp.bfloat16)

    Bt = _pick_block_b(B, block_b)
    grid = (B // Bt,)

    kernel = functools.partial(_head_kernel, scale=scale, hs=H)

    return pl.pallas_call(
        kernel,
        out_shape=jax.ShapeDtypeStruct((B, T, H), x.dtype),
        grid_spec=pltpu.PrefetchScalarGridSpec(
            num_scalar_prefetch=0,
            grid=grid,
            in_specs=[
                pl.BlockSpec((Bt, T, C), lambda b: (b, 0, 0)),
                pl.BlockSpec((C, 3 * H), lambda b: (0, 0)),
            ],
            out_specs=pl.BlockSpec((Bt, T, H), lambda b: (b, 0, 0)),
        ),
        compiler_params=pltpu.CompilerParams(
            dimension_semantics=("parallel",),
            vmem_limit_bytes=32 * 1024 * 1024,   # safe on v7x's smaller VMEM
        ),
    )(x, wqkv)


def head_reference(x, wq, wk, wv):
    """Pure-JAX f32 reference mirroring the PyTorch forward (eval mode)."""
    k = x @ wk
    q = x @ wq
    v = x @ wv
    wei = (q @ jnp.swapaxes(k, -2, -1)) * (k.shape[-1] ** -0.5)
    T = x.shape[1]
    tril = jnp.tril(jnp.ones((T, T), dtype=bool))
    wei = jnp.where(tril, wei, -jnp.inf)
    wei = jax.nn.softmax(wei, axis=-1)
    return wei @ v


if __name__ == "__main__":
    key = jax.random.PRNGKey(0)
    kx, kk, kq, kv = jax.random.split(key, 4)

    T = block_size  # 128

    # nn.Linear(n_embd, head_size, bias=False) weights are (head_size, n_embd);
    # we store W^T of shape (n_embd, head_size) for direct x @ W.
    winit = (n_embd ** -0.5)
    wk = jax.random.uniform(kk, (n_embd, head_size), jnp.float32, -winit, winit)
    wq = jax.random.uniform(kq, (n_embd, head_size), jnp.float32, -winit, winit)
    wv = jax.random.uniform(kv, (n_embd, head_size), jnp.float32, -winit, winit)

    ok = True
    for B in (2, 8):   # B=2 -> Bt=1 (grid 2); B=8 -> Bt=4 (grid 2, batched path)
        x = jax.random.normal(kx, (B, T, n_embd), dtype=jnp.float32)

        out = head_forward(x, wq, wk, wv)
        out = jax.block_until_ready(out)

        ref = head_reference(x, wq, wk, wv)
        assert out.shape == (B, T, head_size)
        # bf16 matmul operands + approx reciprocal -> tolerance loosened vs f32 ref.
        ok &= bool(jnp.allclose(out, ref, atol=2e-2, rtol=2e-2))

    assert ok, "mismatch vs reference"
    print("KERNEL_OK")
</pallas_src>

<mosaic_0001>
module attributes {stable_mosaic.version = 11 : i64} {
  func.func @_head_kernel(%arg0: i32, %arg1: memref<1x128x384xf32, #tpu.memory_space<vmem>>, %arg2: memref<384x192xbf16, #tpu.memory_space<vmem>>, %arg3: memref<1x128x64xf32, #tpu.memory_space<vmem>>) attributes {dimension_semantics = [#tpu.dimension_semantics<parallel>], iteration_bounds = array<i64: 2>, scalar_prefetch = 0 : i64, scratch_operands = 0 : i64, tpu.core_type = #tpu.core_type<tc>, window_params = [{transform_indices = @transform_0, window_bounds = array<i64: 1, 128, 384>}, {pipeline_mode = #tpu.pipeline_mode<synchronous>, transform_indices = @transform_1, window_bounds = array<i64: 384, 192>}, {transform_indices = @transform_2, window_bounds = array<i64: 1, 128, 64>}]} {
    %c0 = arith.constant 0 : index
    %c0_0 = arith.constant 0 : index
    %c0_1 = arith.constant 0 : index
    %0 = vector.load %arg1[%c0, %c0_0, %c0_1] : memref<1x128x384xf32, #tpu.memory_space<vmem>>, vector<1x128x384xf32>
    %1 = arith.truncf %0 : vector<1x128x384xf32> to vector<1x128x384xbf16>
    %c0_2 = arith.constant 0 : index
    %c0_3 = arith.constant 0 : index
    %2 = vector.load %arg2[%c0_2, %c0_3] : memref<384x192xbf16, #tpu.memory_space<vmem>>, vector<384x192xbf16>
    "tpu.trace_start"() <{level = 10 : i32, message = "btc,ch->bth"}> : () -> ()
    %cst = arith.constant dense<0.000000e+00> : vector<1x128x192xf32>
    %3 = tpu.matmul %1, %2, %cst {dimension_numbers = #tpu.dot_dimension_numbers<[2], [0], [0, 1], [1], [0, 0, 0, 1, 1, 1], [], []>} : vector<1x128x384xbf16>, vector<384x192xbf16>, vector<1x128x192xf32> -> vector<1x128x192xf32>
    "tpu.trace_stop"() : () -> ()
    %4 = vector.extract_strided_slice %3 {offsets = [0, 0, 0], sizes = [1, 128, 64], strides = [1, 1, 1]} : vector<1x128x192xf32> to vector<1x128x64xf32>
    %cst_4 = arith.constant 1.250000e-01 : f32
    %5 = vector.broadcast %cst_4 : f32 to vector<1x128x64xf32>
    %6 = arith.mulf %4, %5 : vector<1x128x64xf32>
    %7 = vector.extract_strided_slice %3 {offsets = [0, 0, 64], sizes = [1, 128, 64], strides = [1, 1, 1]} : vector<1x128x192xf32> to vector<1x128x64xf32>
    %8 = vector.extract_strided_slice %3 {offsets = [0, 0, 128], sizes = [1, 128, 64], strides = [1, 1, 1]} : vector<1x128x192xf32> to vector<1x128x64xf32>
    %9 = arith.truncf %6 : vector<1x128x64xf32> to vector<1x128x64xbf16>
    %10 = arith.truncf %7 : vector<1x128x64xf32> to vector<1x128x64xbf16>
    "tpu.trace_start"() <{level = 10 : i32, message = "bqh,bkh->bqk"}> : () -> ()
    %cst_5 = arith.constant dense<0.000000e+00> : vector<1x128x128xf32>
    %11 = tpu.matmul %9, %10, %cst_5 {dimension_numbers = #tpu.dot_dimension_numbers<[2], [2], [1], [1], [0, 0, 0, 1, 1, 1], [0], [0]>} : vector<1x128x64xbf16>, vector<1x128x64xbf16>, vector<1x128x128xf32> -> vector<1x128x128xf32>
    "tpu.trace_stop"() : () -> ()
    %12 = tpu.iota {dimensions = array<i32: 0>} : vector<128x128xi32>
    %13 = tpu.iota {dimensions = array<i32: 1>} : vector<128x128xi32>
    %14 = arith.cmpi sle, %13, %12 : vector<128x128xi32>
    %15 = vector.shape_cast %14 : vector<128x128xi1> to vector<1x128x128xi1>
    %cst_6 = arith.constant 0xFF800000 : f32
    %16 = vector.broadcast %cst_6 : f32 to vector<1x128x128xf32>
    %17 = arith.select %15, %11, %16 : vector<1x128x128xi1>, vector<1x128x128xf32>
    %cst_7 = arith.constant dense<0xFF800000> : vector<1x128xf32>
    %18 = vector.multi_reduction <maximumf>, %17, %cst_7 [2] : vector<1x128x128xf32> to vector<1x128xf32>
    %19 = vector.shape_cast %18 : vector<1x128xf32> to vector<1x128x1xf32>
    %20 = vector.broadcast %19 : vector<1x128x1xf32> to vector<1x128x128xf32>
    %21 = arith.subf %17, %20 : vector<1x128x128xf32>
    %22 = math.exp %21 : vector<1x128x128xf32>
    %cst_8 = arith.constant dense<0.000000e+00> : vector<1x128xf32>
    %23 = vector.multi_reduction <add>, %22, %cst_8 [2] : vector<1x128x128xf32> to vector<1x128xf32>
    %24 = vector.shape_cast %23 : vector<1x128xf32> to vector<1x128x1xf32>
    %25 = tpu.reciprocal %24 {approx = true} : vector<1x128x1xf32> -> vector<1x128x1xf32>
    %26 = vector.broadcast %25 : vector<1x128x1xf32> to vector<1x128x128xf32>
    %27 = arith.mulf %22, %26 : vector<1x128x128xf32>
    %28 = arith.truncf %27 : vector<1x128x128xf32> to vector<1x128x128xbf16>
    %29 = arith.truncf %8 : vector<1x128x64xf32> to vector<1x128x64xbf16>
    "tpu.trace_start"() <{level = 10 : i32, message = "bqk,bkh->bqh"}> : () -> ()
    %cst_9 = arith.constant dense<0.000000e+00> : vector<1x128x64xf32>
    %30 = tpu.matmul %28, %29, %cst_9 {dimension_numbers = #tpu.dot_dimension_numbers<[2], [1], [1], [2], [0, 0, 0, 1, 1, 2], [0], [0]>} : vector<1x128x128xbf16>, vector<1x128x64xbf16>, vector<1x128x64xf32> -> vector<1x128x64xf32>
    "tpu.trace_stop"() : () -> ()
    %c0_10 = arith.constant 0 : index
    %c0_11 = arith.constant 0 : index
    %c0_12 = arith.constant 0 : index
    %31 = vector.load %arg3[%c0_10, %c0_11, %c0_12] : memref<1x128x64xf32, #tpu.memory_space<vmem>>, vector<1x128x64xf32>
    tpu.vector_store %arg3[%c0_10, %c0_11, %c0_12], %30 {strides = array<i32>} : memref<1x128x64xf32, #tpu.memory_space<vmem>>, vector<1x128x64xf32>,
    return
  }
  func.func @transform_0(%arg0: i32) -> (i32, i32, i32) {
    %c0_i32 = arith.constant 0 : i32
    %c0_i32_0 = arith.constant 0 : i32
    %c0_i32_1 = arith.constant 0 : i32
    return %arg0, %c0_i32, %c0_i32_0 : i32, i32, i32
  }
  func.func @transform_1(%arg0: i32) -> (i32, i32) {
    %c0_i32 = arith.constant 0 : i32
    %c0_i32_0 = arith.constant 0 : i32
    %c0_i32_1 = arith.constant 0 : i32
    return %c0_i32, %c0_i32_0 : i32, i32
  }
  func.func @transform_2(%arg0: i32) -> (i32, i32, i32) {
    %c0_i32 = arith.constant 0 : i32
    %c0_i32_0 = arith.constant 0 : i32
    %c0_i32_1 = arith.constant 0 : i32
    return %arg0, %c0_i32, %c0_i32_0 : i32, i32, i32
  }
}

</mosaic_0001>

<llo_original>
// kernel: tpu_custom_call.1
$region0: #{tpu_custom_call.1}
  #allocation0 [shape = 'u32[]', space=smem, size = 0x4, offset = 0x4, fixed_abs, tag = 'smem constant byte address 0x4 - core index']
  #allocation1 [shape = 'u32[144,128]{1,0:T(1,128)}', space=vmem, size = 0x12000, scoped, tag = 'internal scratch']
  %s0 = inlined_call_operand.hbm [shape: f32[2,128,384], index: 0, kind: input, shape index: {}]
  %s1 = inlined_call_operand.vmem [shape: bf16[384,192], index: 1, kind: input, shape index: {}]
  %s2 = inlined_call_operand.vmem [shape: f32[2,128,64], index: 2, kind: output, shape index: {}]
  %s3 = sld [smem:[#allocation0]]
  $region45: #{tpu_custom_call.1} parent=0
    _
  %s5 = ssub.s32 1, %s3
  %s6 = scalar_select 0, %s5, %s3
  $region1: #{tpu_custom_call.1} parent=0
    #allocation2 [shape = 'u8[393216]{0}', space=vmem, size = 0x60000, scoped, tag = 'input window, operand 0']
    #allocation3 [shape = 's32[2]{0}', space=sflag, size = 0x8, scoped, tag = 'scoped memory for tpu_custom_call.1']
    %7 = vsyncpa [#allocation3], 0
    %s8 = scalar_lea.sflag [#allocation3], 1
    %9 = vsyncpa %s8, 0
    loop: start=0, step=1, limit=4
    $region2: #{tpu_custom_call.1} parent=1 // loop_pre_header
      _
    $region3: #{tpu_custom_call.1} parent=1 // loop_header
      %s11 = sphi 0, %s15
      %p12 = scmp.ge.s32.totalorder %s11, 4
      %s21 = sphi 0, %s23
      %s24 = sphi 0, %s21
      %s25 = sphi 0, %s24
      %s41 = sphi 0, %s25
      %s45 = sphi 0, %s45
      %s47 = sphi 0, %s45
      %s48 = sphi 0, %s47
      %s62 = sphi 0, %s48
      %s68 = sphi 0, %s70
      %s71 = sphi 0, %s68
      %s72 = sphi 0, %s71
      %s88 = sphi 0, %s72
    $region4: #{tpu_custom_call.1} parent=1 // loop_header_branch
      %14 = sbr.rel (%p12) target = $region8
    $region5: #{tpu_custom_call.1} parent=1 // loop_body
      %s16 = ssub.s32 %s11, 1
      %s17 = ssub.s32 %s11, 2
      %s18 = sadd.s32 %s11, 1
      %s19 = ssub.s32 %s11, %s18
      %p20 = scmp.eq.s32.totalorder %s19, 0
      %s22 = sadd.s32 %s21, 1
      %s23 = scalar_select %p20, %s21, %s22
      %p26 = pneg %p20
      %p27 = scmp.eq.s32.totalorder %s11, 1
      %p28 = por %p26, %p27
      %p29 = scmp.ne.s32.totalorder %s21, %s24
      %p30 = scmp.eq.s32.totalorder %s11, 0
      %p31 = por %p29, %p30
      %p32 = scmp.ne.s32.totalorder %s21, %s24
      %p33 = scmp.eq.s32.totalorder %s16, 1
      %p34 = por %p32, %p33
      %p35 = scmp.ne.s32.totalorder %s24, %s25
      %p36 = scmp.eq.s32.totalorder %s16, 0
      %p37 = por %p35, %p36
      %p38 = scmp.ne.s32.totalorder %s24, %s25
      %p39 = scmp.eq.s32.totalorder %s17, 1
      %p40 = por %p38, %p39
      %p42 = scmp.ne.s32.totalorder %s25, %s41
      %p43 = scmp.eq.s32.totalorder %s17, 0
      %p44 = por %p42, %p43
      %s46 = sadd.s32 %s45, 1
      %p49 = scmp.eq.s32.totalorder %s11, 1
      %p50 = scmp.ne.s32.totalorder %s45, %s47
      %p51 = scmp.eq.s32.totalorder %s11, 0
      %p52 = por %p50, %p51
      %p53 = scmp.ne.s32.totalorder %s45, %s47
      %p54 = scmp.eq.s32.totalorder %s16, 1
      %p55 = por %p53, %p54
      %p56 = scmp.ne.s32.totalorder %s47, %s48
      %p57 = scmp.eq.s32.totalorder %s16, 0
      %p58 = por %p56, %p57
      %p59 = scmp.ne.s32.totalorder %s47, %s48
      %p60 = scmp.eq.s32.totalorder %s17, 1
      %p61 = por %p59, %p60
      %p63 = scmp.ne.s32.totalorder %s48, %s62
      %p64 = scmp.eq.s32.totalorder %s17, 0
      %p65 = por %p63, %p64
      %s66 = ssub.s32 %s11, %s18
      %p67 = scmp.eq.s32.totalorder %s66, 0
      %s69 = sadd.s32 %s68, 1
      %s70 = scalar_select %p67, %s68, %s69
      %p73 = pneg %p67
      %p74 = scmp.eq.s32.totalorder %s11, 1
      %p75 = por %p73, %p74
      %p76 = scmp.ne.s32.totalorder %s68, %s71
      %p77 = scmp.eq.s32.totalorder %s11, 0
      %p78 = por %p76, %p77
      %p79 = scmp.ne.s32.totalorder %s68, %s71
      %p80 = scmp.eq.s32.totalorder %s16, 1
      %p81 = por %p79, %p80
      %p82 = scmp.ne.s32.totalorder %s71, %s72
      %p83 = scmp.eq.s32.totalorder %s16, 0
      %p84 = por %p82, %p83
      %p85 = scmp.ne.s32.totalorder %s71, %s72
      %p86 = scmp.eq.s32.totalorder %s17, 1
      %p87 = por %p85, %p86
      %p89 = scmp.ne.s32.totalorder %s72, %s88
      %p90 = scmp.eq.s32.totalorder %s17, 0
      %p91 = por %p89, %p90
      %p92 = scmp.le.s32.totalorder 1, %s11
      %p93 = scmp.lt.s32.totalorder %s11, 3
      %p94 = pnand %p92, %p93
      %p95 = pneg %p94
      // Predicated region
      $region9: #{tpu_custom_call.1} parent=5 // pred_check
        _
      $region10: #{tpu_custom_call.1} parent=5 // pred_check_branch
        %97 = sbr.rel (%p94) target = $region12
      $region11: #{tpu_custom_call.1} parent=5 // pred_region
        %s98 = ssub.s32 %s11, 1
        // Predicated region
        $region13: #{tpu_custom_call.1} parent=11 // pred_check
          %p99 = pneg %p58
        $region14: #{tpu_custom_call.1} parent=11 // pred_check_branch
          %101 = sbr.rel (%p99) target = $region16
        $region15: #{tpu_custom_call.1} parent=11 // pred_region
          _
        $region16: #{tpu_custom_call.1} parent=11 // pred_fallthru
          _
      $region12: #{tpu_custom_call.1} parent=5 // pred_fallthru
        _
      %p102 = scmp.lt.s32.totalorder %s11, 2
      // Predicated region
      $region17: #{tpu_custom_call.1} parent=5 // pred_check
        %p103 = pneg %p102
      $region18: #{tpu_custom_call.1} parent=5 // pred_check_branch
        %105 = sbr.rel (%p103) target = $region20
      $region19: #{tpu_custom_call.1} parent=5 // pred_region
        // Predicated region
        $region21: #{tpu_custom_call.1} parent=19 // pred_check
          %p106 = pneg %p31
        $region22: #{tpu_custom_call.1} parent=19 // pred_check_branch
          %108 = sbr.rel (%p106) target = $region24
        $region23: #{tpu_custom_call.1} parent=19 // pred_region
          %s109 = sand.u32 %s21, 1
          %s110 = scalar_lea.sflag [#allocation3], %s109
          %s111 = sand.u32 %s21, 1
          %s112 = smul.addr %s111, 384
          %s113 = scalar_lea.vmem [#allocation2], %s112
          %s115 = ssub.s32 6144, 6144
          %116 = vsyncadd %s110, %s115
          %s117 = smul.addr %s11, 48
          %s118 = smul.addr %s117, 128
          %s119 = scalar_lea.hbm %s0, %s118
          %s120 = sshll.u32 %s113, 4
          %s121 = int_to_ptr.vmem [resolvable:$true] %s120
          %126 = dma.hbm_to_vmem [thread:$0]  %s119, 6144, %s121, %s110, 384, 384, 24
        $region24: #{tpu_custom_call.1} parent=19 // pred_fallthru
          _
      $region20: #{tpu_custom_call.1} parent=5 // pred_fallthru
        _
      %p127 = scmp.le.s32.totalorder 1, %s11
      %p128 = scmp.lt.s32.totalorder %s11, 3
      %p129 = pnand %p127, %p128
      %p130 = pneg %p129
      // Predicated region
      $region25: #{tpu_custom_call.1} parent=5 // pred_check
        _
      $region26: #{tpu_custom_call.1} parent=5 // pred_check_branch
        %132 = sbr.rel (%p129) target = $region28
      $region27: #{tpu_custom_call.1} parent=5 // pred_region
        %s133 = ssub.s32 %s11, 1
        %s134 = sand.u32 %s24, 1
        %s135 = scalar_lea.sflag [#allocation3], %s134
        %s136 = sand.u32 %s24, 1
        %s137 = smul.addr %s136, 384
        %s138 = scalar_lea.vmem [#allocation2], %s137
        // Predicated region
        $region29: #{tpu_custom_call.1} parent=27 // pred_check
          %p139 = pneg %p37
        $region30: #{tpu_custom_call.1} parent=27 // pred_check_branch
          %141 = sbr.rel (%p139) target = $region32
        $region31: #{tpu_custom_call.1} parent=27 // pred_region
          %142 = dma.done %s135, 6144
        $region32: #{tpu_custom_call.1} parent=27 // pred_fallthru
          _
        %s143 = sand.u32 %s24, 1
        %s144 = scalar_lea.sflag [#allocation3], %s143
        %s145 = sand.u32 %s24, 1
        %s146 = smul.addr %s145, 384
        %s147 = scalar_lea.vmem [#allocation2], %s146
        %p148 = pneg %p37
        %p149 = pneg %p34
        %p150 = pneg %p58
        %p151 = pneg %p55
        %p152 = pneg %p84
        %p153 = pneg %p81
        %p154 = scmp.lt.s32.totalorder %s16, 1
        %s155 = scalar_select %p154, %s16, 1
        %s156 = smul.addr %s155, 16
        %s157 = smul.addr %s156, 8
        %s158 = scalar_lea.vmem %s2, %s157
        %p159 = scmp.lt.s32.totalorder %s16, 1
        %s160 = scalar_select %p159, %s16, 1
        %s161 = smul.addr %s160, 16
        %s162 = smul.addr %s161, 8
        %s163 = scalar_lea.vmem %s2, %s162
        %v165 = vld [vmem:[%s138] sm:$0xff]
        %v166 = vld [vmem:[%s138 + $0x8] sm:$0xff]
        %v167 = vld [vmem:[%s138 + $0x10] sm:$0xff]
        %v168 = vld [vmem:[%s138 + $0x18] sm:$0xff]
        %v169 = vld [vmem:[%s138 + $0x20] sm:$0xff]
        %v170 = vld [vmem:[%s138 + $0x28] sm:$0xff]
        %v171 = vld [vmem:[%s138 + $0x30] sm:$0xff]
        %v172 = vld [vmem:[%s138 + $0x38] sm:$0xff]
        %v173 = vld [vmem:[%s138 + $0x40] sm:$0xff]
        %v174 = vld [vmem:[%s138 + $0x48] sm:$0xff]
        %v175 = vld [vmem:[%s138 + $0x50] sm:$0xff]
        %v176 = vld [vmem:[%s138 + $0x58] sm:$0xff]
        %v177 = vld [vmem:[%s138 + $0x60] sm:$0xff]
        %v178 = vld [vmem:[%s138 + $0x68] sm:$0xff]
        %v179 = vld [vmem:[%s138 + $0x70] sm:$0xff]
        %v180 = vld [vmem:[%s138 + $0x78] sm:$0xff]
        %v181 = vld [vmem:[%s138 + $0x80] sm:$0xff]
        %v182 = vld [vmem:[%s138 + $0x88] sm:$0xff]
        %v183 = vld [vmem:[%s138 + $0x90] sm:$0xff]
        %v184 = vld [vmem:[%s138 + $0x98] sm:$0xff]
        %v185 = vld [vmem:[%s138 + $0xa0] sm:$0xff]
        %v186 = vld [vmem:[%s138 + $0xa8] sm:$0xff]
        %v187 = vld [vmem:[%s138 + $0xb0] sm:$0xff]
        %v188 = vld [vmem:[%s138 + $0xb8] sm:$0xff]
        %v189 = vld [vmem:[%s138 + $0xc0] sm:$0xff]
        %v190 = vld [vmem:[%s138 + $0xc8] sm:$0xff]
        %v191 = vld [vmem:[%s138 + $0xd0] sm:$0xff]
        %v192 = vld [vmem:[%s138 + $0xd8] sm:$0xff]
        %v193 = vld [vmem:[%s138 + $0xe0] sm:$0xff]
        %v194 = vld [vmem:[%s138 + $0xe8] sm:$0xff]
        %v195 = vld [vmem:[%s138 + $0xf0] sm:$0xff]
        %v196 = vld [vmem:[%s138 + $0xf8] sm:$0xff]
        %v197 = vld [vmem:[%s138 + $0x100] sm:$0xff]
        %v198 = vld [vmem:[%s138 + $0x108] sm:$0xff]
        %v199 = vld [vmem:[%s138 + $0x110] sm:$0xff]
        %v200 = vld [vmem:[%s138 + $0x118] sm:$0xff]
        %v201 = vld [vmem:[%s138 + $0x120] sm:$0xff]
        %v202 = vld [vmem:[%s138 + $0x128] sm:$0xff]
        %v203 = vld [vmem:[%s138 + $0x130] sm:$0xff]
        %v204 = vld [vmem:[%s138 + $0x138] sm:$0xff]
        %v205 = vld [vmem:[%s138 + $0x140] sm:$0xff]
        %v206 = vld [vmem:[%s138 + $0x148] sm:$0xff]
        %v207 = vld [vmem:[%s138 + $0x150] sm:$0xff]
        %v208 = vld [vmem:[%s138 + $0x158] sm:$0xff]
        %v209 = vld [vmem:[%s138 + $0x160] sm:$0xff]
        %v210 = vld [vmem:[%s138 + $0x168] sm:$0xff]
        %v211 = vld [vmem:[%s138 + $0x170] sm:$0xff]
        %v212 = vld [vmem:[%s138 + $0x178] sm:$0xff]
        %v213 = vpack.c.bf16 %v168, %v165
        %v214 = vpack.c.bf16 %v169, %v166
        %v215 = vpack.c.bf16 %v170, %v167
        %v216 = vpack.c.bf16 %v174, %v171
        %v217 = vpack.c.bf16 %v175, %v172
        %v218 = vpack.c.bf16 %v176, %v173
        %v219 = vpack.c.bf16 %v180, %v177
        %v220 = vpack.c.bf16 %v181, %v178
        %v221 = vpack.c.bf16 %v182, %v179
        %v222 = vpack.c.bf16 %v186, %v183
        %v223 = vpack.c.bf16 %v187, %v184
        %v224 = vpack.c.bf16 %v188, %v185
        %v225 = vpack.c.bf16 %v192, %v189
        %v226 = vpack.c.bf16 %v193, %v190
        %v227 = vpack.c.bf16 %v194, %v191
        %v228 = vpack.c.bf16 %v198, %v195
        %v229 = vpack.c.bf16 %v199, %v196
        %v230 = vpack.c.bf16 %v200, %v197
        %v231 = vpack.c.bf16 %v204, %v201
        %v232 = vpack.c.bf16 %v205, %v202
        %v233 = vpack.c.bf16 %v206, %v203
        %v234 = vpack.c.bf16 %v210, %v207
        %v235 = vpack.c.bf16 %v211, %v208
        %v236 = vpack.c.bf16 %v212, %v209
        %v237 = vld [vmem:[%s1] sm:$0xff]
        %v238 = vld [vmem:[%s1 + $0x8] sm:$0xff]
        %v239 = vld [vmem:[%s1 + $0x10] sm:$0xff]
        %v240 = vld [vmem:[%s1 + $0x18] sm:$0xff]
        %v241 = vld [vmem:[%s1 + $0x20] sm:$0xff]
        %v242 = vld [vmem:[%s1 + $0x28] sm:$0xff]
        %v243 = vld [vmem:[%s1 + $0x30] sm:$0xff]
        %v244 = vld [vmem:[%s1 + $0x38] sm:$0xff]
        %v245 = vld [vmem:[%s1 + $0x40] sm:$0xff]
        %v246 = vld [vmem:[%s1 + $0x48] sm:$0xff]
        %v247 = vld [vmem:[%s1 + $0x50] sm:$0xff]
        %v248 = vld [vmem:[%s1 + $0x58] sm:$0xff]
        %v249 = vld [vmem:[%s1 + $0x60] sm:$0xff]
        %v250 = vld [vmem:[%s1 + $0x68] sm:$0xff]
        %v251 = vld [vmem:[%s1 + $0x70] sm:$0xff]
        %v252 = vld [vmem:[%s1 + $0x78] sm:$0xff]
        %v253 = vld [vmem:[%s1 + $0x80] sm:$0xff]
        %v254 = vld [vmem:[%s1 + $0x88] sm:$0xff]
        %v255 = vld [vmem:[%s1 + $0x90] sm:$0xff]
        %v256 = vld [vmem:[%s1 + $0x98] sm:$0xff]
        %v257 = vld [vmem:[%s1 + $0xa0] sm:$0xff]
        %v258 = vld [vmem:[%s1 + $0xa8] sm:$0xff]
        %v259 = vld [vmem:[%s1 + $0xb0] sm:$0xff]
        %v260 = vld [vmem:[%s1 + $0xb8] sm:$0xff]
        %v261 = vld [vmem:[%s1 + $0xc0] sm:$0xff]
        %v262 = vld [vmem:[%s1 + $0xc8] sm:$0xff]
        %v263 = vld [vmem:[%s1 + $0xd0] sm:$0xff]
        %v264 = vld [vmem:[%s1 + $0xd8] sm:$0xff]
        %v265 = vld [vmem:[%s1 + $0xe0] sm:$0xff]
        %v266 = vld [vmem:[%s1 + $0xe8] sm:$0xff]
        %v267 = vld [vmem:[%s1 + $0xf0] sm:$0xff]
        %v268 = vld [vmem:[%s1 + $0xf8] sm:$0xff]
        %v269 = vld [vmem:[%s1 + $0x100] sm:$0xff]
        %v270 = vld [vmem:[%s1 + $0x108] sm:$0xff]
        %v271 = vld [vmem:[%s1 + $0x110] sm:$0xff]
        %v272 = vld [vmem:[%s1 + $0x118] sm:$0xff]
        %v273 = vld [vmem:[%s1 + $0x120] sm:$0xff]
        %v274 = vld [vmem:[%s1 + $0x128] sm:$0xff]
        %v275 = vld [vmem:[%s1 + $0x130] sm:$0xff]
        %v276 = vld [vmem:[%s1 + $0x138] sm:$0xff]
        %v277 = vld [vmem:[%s1 + $0x140] sm:$0xff]
        %v278 = vld [vmem:[%s1 + $0x148] sm:$0xff]
        %v279 = vld [vmem:[%s1 + $0x150] sm:$0xff]
        %v280 = vld [vmem:[%s1 + $0x158] sm:$0xff]
        %v281 = vld [vmem:[%s1 + $0x160] sm:$0xff]
        %v282 = vld [vmem:[%s1 + $0x168] sm:$0xff]
        %v283 = vld [vmem:[%s1 + $0x170] sm:$0xff]
        %v284 = vld [vmem:[%s1 + $0x178] sm:$0xff]
        %v333 = vunpack.c.l.b16 %v237
        %v334 = vunpack.c.h.b16 %v237
        %v335 = vunpack.c.l.b16 %v238
        %v336 = vunpack.c.h.b16 %v238
        %v337 = vunpack.c.l.b16 %v239
        %v338 = vunpack.c.h.b16 %v239
        %v339 = vunpack.c.l.b16 %v240
        %v340 = vunpack.c.h.b16 %v240
        %v341 = vunpack.c.l.b16 %v241
        %v342 = vunpack.c.h.b16 %v241
        %v343 = vunpack.c.l.b16 %v242
        %v344 = vunpack.c.h.b16 %v242
        %v345 = vunpack.c.l.b16 %v243
        %v346 = vunpack.c.h.b16 %v243
        %v347 = vunpack.c.l.b16 %v244
        %v348 = vunpack.c.h.b16 %v244
        %v349 = vunpack.c.l.b16 %v245
        %v350 = vunpack.c.h.b16 %v245
        %v351 = vunpack.c.l.b16 %v246
        %v352 = vunpack.c.h.b16 %v246
        %v353 = vunpack.c.l.b16 %v247
        %v354 = vunpack.c.h.b16 %v247
        %v355 = vunpack.c.l.b16 %v248
        %v356 = vunpack.c.h.b16 %v248
        %v357 = vunpack.c.l.b16 %v249
        %v358 = vunpack.c.h.b16 %v249
        %v359 = vunpack.c.l.b16 %v250
        %v360 = vunpack.c.h.b16 %v250
        %v361 = vunpack.c.l.b16 %v251
        %v362 = vunpack.c.h.b16 %v251
        %v363 = vunpack.c.l.b16 %v252
        %v364 = vunpack.c.h.b16 %v252
        %v365 = vunpack.c.l.b16 %v253
        %v366 = vunpack.c.h.b16 %v253
        %v367 = vunpack.c.l.b16 %v254
        %v368 = vunpack.c.h.b16 %v254
        %v369 = vunpack.c.l.b16 %v255
        %v370 = vunpack.c.h.b16 %v255
        %v371 = vunpack.c.l.b16 %v256
        %v372 = vunpack.c.h.b16 %v256
        %v373 = vunpack.c.l.b16 %v257
        %v374 = vunpack.c.h.b16 %v257
        %v375 = vunpack.c.l.b16 %v258
        %v376 = vunpack.c.h.b16 %v258
        %v377 = vunpack.c.l.b16 %v259
        %v378 = vunpack.c.h.b16 %v259
        %v379 = vunpack.c.l.b16 %v260
        %v380 = vunpack.c.h.b16 %v260
        %v381 = vunpack.c.l.b16 %v261
        %v382 = vunpack.c.h.b16 %v261
        %v383 = vunpack.c.l.b16 %v262
        %v384 = vunpack.c.h.b16 %v262
        %v385 = vunpack.c.l.b16 %v263
        %v386 = vunpack.c.h.b16 %v263
        %v387 = vunpack.c.l.b16 %v264
        %v388 = vunpack.c.h.b16 %v264
        %v389 = vunpack.c.l.b16 %v265
        %v390 = vunpack.c.h.b16 %v265
        %v391 = vunpack.c.l.b16 %v266
        %v392 = vunpack.c.h.b16 %v266
        %v393 = vunpack.c.l.b16 %v267
        %v394 = vunpack.c.h.b16 %v267
        %v395 = vunpack.c.l.b16 %v268
        %v396 = vunpack.c.h.b16 %v268
        %v397 = vunpack.c.l.b16 %v269
        %v398 = vunpack.c.h.b16 %v269
        %v399 = vunpack.c.l.b16 %v270
        %v400 = vunpack.c.h.b16 %v270
        %v401 = vunpack.c.l.b16 %v271
        %v402 = vunpack.c.h.b16 %v271
        %v403 = vunpack.c.l.b16 %v272
        %v404 = vunpack.c.h.b16 %v272
        %v405 = vunpack.c.l.b16 %v273
        %v406 = vunpack.c.h.b16 %v273
        %v407 = vunpack.c.l.b16 %v274
        %v408 = vunpack.c.h.b16 %v274
        %v409 = vunpack.c.l.b16 %v275
        %v410 = vunpack.c.h.b16 %v275
        %v411 = vunpack.c.l.b16 %v276
        %v412 = vunpack.c.h.b16 %v276
        %v413 = vunpack.c.l.b16 %v277
        %v414 = vunpack.c.h.b16 %v277
        %v415 = vunpack.c.l.b16 %v278
        %v416 = vunpack.c.h.b16 %v278
        %v417 = vunpack.c.l.b16 %v279
        %v418 = vunpack.c.h.b16 %v279
        %v419 = vunpack.c.l.b16 %v280
        %v420 = vunpack.c.h.b16 %v280
        %v421 = vunpack.c.l.b16 %v281
        %v422 = vunpack.c.h.b16 %v281
        %v423 = vunpack.c.l.b16 %v282
        %v424 = vunpack.c.h.b16 %v282
        %v425 = vunpack.c.l.b16 %v283
        %v426 = vunpack.c.h.b16 %v283
        %v427 = vunpack.c.l.b16 %v284
        %v428 = vunpack.c.h.b16 %v284
        %v429 = vpack.c.b16 %v335, %v333
        %v430 = vpack.c.b16 %v336, %v334
        %v431 = vpack.c.b16 %v339, %v337
        %v432 = vpack.c.b16 %v340, %v338
        %v433 = vpack.c.b16 %v343, %v341
        %v434 = vpack.c.b16 %v344, %v342
        %v435 = vpack.c.b16 %v347, %v345
        %v436 = vpack.c.b16 %v348, %v346
        %v437 = vpack.c.b16 %v351, %v349
        %v438 = vpack.c.b16 %v352, %v350
        %v439 = vpack.c.b16 %v355, %v353
        %v440 = vpack.c.b16 %v356, %v354
        %v441 = vpack.c.b16 %v359, %v357
        %v442 = vpack.c.b16 %v360, %v358
        %v443 = vpack.c.b16 %v363, %v361
        %v444 = vpack.c.b16 %v364, %v362
        %v445 = vpack.c.b16 %v367, %v365
        %v446 = vpack.c.b16 %v368, %v366
        %v447 = vpack.c.b16 %v371, %v369
        %v448 = vpack.c.b16 %v372, %v370
        %v449 = vpack.c.b16 %v375, %v373
        %v450 = vpack.c.b16 %v376, %v374
        %v451 = vpack.c.b16 %v379, %v377
        %v452 = vpack.c.b16 %v380, %v378
        %v453 = vpack.c.b16 %v383, %v381
        %v454 = vpack.c.b16 %v384, %v382
        %v455 = vpack.c.b16 %v387, %v385
        %v456 = vpack.c.b16 %v388, %v386
        %v457 = vpack.c.b16 %v391, %v389
        %v458 = vpack.c.b16 %v392, %v390
        %v459 = vpack.c.b16 %v395, %v393
        %v460 = vpack.c.b16 %v396, %v394
        %v461 = vpack.c.b16 %v399, %v397
        %v462 = vpack.c.b16 %v400, %v398
        %v463 = vpack.c.b16 %v403, %v401
        %v464 = vpack.c.b16 %v404, %v402
        %v465 = vpack.c.b16 %v407, %v405
        %v466 = vpack.c.b16 %v408, %v406
        %v467 = vpack.c.b16 %v411, %v409
        %v468 = vpack.c.b16 %v412, %v410
        %v469 = vpack.c.b16 %v415, %v413
        %v470 = vpack.c.b16 %v416, %v414
        %v471 = vpack.c.b16 %v419, %v417
        %v472 = vpack.c.b16 %v420, %v418
        %v473 = vpack.c.b16 %v423, %v421
        %v474 = vpack.c.b16 %v424, %v422
        %v475 = vpack.c.b16 %v427, %v425
        %v476 = vpack.c.b16 %v428, %v426
        %525 = vmatprep.subr.bf16.mxu0 %v430
        %526 = vmatpush1.bf16.msra.mxu0 %v429
        %527 = vmatprep.subr.bf16.mxu0 %v432
        %528 = vmatpush1.bf16.msra.mxu0 %v431
        %529 = vmatprep.subr.bf16.mxu0 %v434
        %530 = vmatpush1.bf16.msra.mxu0 %v433
        %531 = vmatprep.subr.bf16.mxu0 %v436
        %532 = vmatpush1.bf16.msra.mxu0 %v435
        %533 = vmatprep.subr.bf16.mxu0 %v438
        %534 = vmatpush1.bf16.msra.mxu0 %v437
        %535 = vmatprep.subr.bf16.mxu0 %v440
        %536 = vmatpush1.bf16.msra.mxu0 %v439
        %537 = vmatprep.subr.bf16.mxu0 %v442
        %538 = vmatpush1.bf16.msra.mxu0 %v441
        %539 = vmatprep.subr.bf16.mxu0 %v444
        %540 = vmatpush1.bf16.msra.mxu0 %v443
        %541 = vmatprep.subr.bf16.mxu0 %v446
        %542 = vmatpush1.bf16.msra.mxu0 %v445
        %543 = vmatprep.subr.bf16.mxu0 %v448
        %544 = vmatpush1.bf16.msra.mxu0 %v447
        %545 = vmatprep.subr.bf16.mxu0 %v450
        %546 = vmatpush1.bf16.msra.mxu0 %v449
        %547 = vmatprep.subr.bf16.mxu0 %v452
        %548 = vmatpush1.bf16.msra.mxu0 %v451
        %549 = vmatprep.subr.bf16.mxu0 %v454
        %550 = vmatpush1.bf16.msra.mxu0 %v453
        %551 = vmatprep.subr.bf16.mxu0 %v456
        %552 = vmatpush1.bf16.msra.mxu0 %v455
        %553 = vmatprep.subr.bf16.mxu0 %v458
        %554 = vmatpush1.bf16.msra.mxu0 %v457
        %555 = vmatprep.subr.bf16.mxu0 %v460
        %556 = vmatpush1.bf16.msra.mxu0 %v459
        %557 = vmatprep.mubr.bf16.mxu0 %v214
        %558 = vmatmul.mubr.bf16.gmra.mrb[0].mxu0 %v213
        %v559 = vpop.f32.mrb[0].mxu0
        %v560 = vadd.f32 0.0, %v559
        %v561 = vpop.f32.mrb[0].mxu0
        %v562 = vadd.f32 0.0, %v561
        %v563 = vpop.f32.mrb[0].mxu0
        %v564 = vadd.f32 0.0, %v563
        %v565 = vpop.f32.mrb[0].mxu0
        %v566 = vadd.f32 0.0, %v565
        %567 = vmatprep.mubr.bf16.mxu0 %v217
        %568 = vmatmul.mubr.bf16.gmra.mrb[0].mxu0 %v216
        %v569 = vpop.f32.mrb[0].mxu0
        %v570 = vadd.f32 0.0, %v569
        %v571 = vpop.f32.mrb[0].mxu0
        %v572 = vadd.f32 0.0, %v571
        %v573 = vpop.f32.mrb[0].mxu0
        %v574 = vadd.f32 0.0, %v573
        %v575 = vpop.f32.mrb[0].mxu0
        %v576 = vadd.f32 0.0, %v575
        %577 = vmatprep.mubr.bf16.mxu0 %v220
        %578 = vmatmul.mubr.bf16.gmra.mrb[0].mxu0 %v219
        %v579 = vpop.f32.mrb[0].mxu0
        %v580 = vadd.f32 0.0, %v579
        %v581 = vpop.f32.mrb[0].mxu0
        %v582 = vadd.f32 0.0, %v581
        %v583 = vpop.f32.mrb[0].mxu0
        %v584 = vadd.f32 0.0, %v583
        %v585 = vpop.f32.mrb[0].mxu0
        %v586 = vadd.f32 0.0, %v585
        %587 = vmatprep.mubr.bf16.mxu0 %v223
        %588 = vmatmul.mubr.bf16.gmra.mrb[0].mxu0 %v222
        %v589 = vpop.f32.mrb[0].mxu0
        %v590 = vadd.f32 0.0, %v589
        %v591 = vpop.f32.mrb[0].mxu0
        %v592 = vadd.f32 0.0, %v591
        %v593 = vpop.f32.mrb[0].mxu0
        %v594 = vadd.f32 0.0, %v593
        %v595 = vpop.f32.mrb[0].mxu0
        %v596 = vadd.f32 0.0, %v595
        %597 = vmatprep.mubr.bf16.mxu0 %v226
        %598 = vmatmul.mubr.bf16.gmra.mrb[0].mxu0 %v225
        %v599 = vpop.f32.mrb[0].mxu0
        %v600 = vadd.f32 0.0, %v599
        %v601 = vpop.f32.mrb[0].mxu0
        %v602 = vadd.f32 0.0, %v601
        %v603 = vpop.f32.mrb[0].mxu0
        %v604 = vadd.f32 0.0, %v603
        %v605 = vpop.f32.mrb[0].mxu0
        %v606 = vadd.f32 0.0, %v605
        %607 = vmatprep.mubr.bf16.mxu0 %v229
        %608 = vmatmul.mubr.bf16.gmra.mrb[0].mxu0 %v228
        %v609 = vpop.f32.mrb[0].mxu0
        %v610 = vadd.f32 0.0, %v609
        %v611 = vpop.f32.mrb[0].mxu0
        %v612 = vadd.f32 0.0, %v611
        %v613 = vpop.f32.mrb[0].mxu0
        %v614 = vadd.f32 0.0, %v613
        %v615 = vpop.f32.mrb[0].mxu0
        %v616 = vadd.f32 0.0, %v615
        %617 = vmatprep.mubr.bf16.mxu0 %v232
        %618 = vmatmul.mubr.bf16.gmra.mrb[0].mxu0 %v231
        %v619 = vpop.f32.mrb[0].mxu0
        %v620 = vadd.f32 0.0, %v619
        %v621 = vpop.f32.mrb[0].mxu0
        %v622 = vadd.f32 0.0, %v621
        %v623 = vpop.f32.mrb[0].mxu0
        %v624 = vadd.f32 0.0, %v623
        %v625 = vpop.f32.mrb[0].mxu0
        %v626 = vadd.f32 0.0, %v625
        %627 = vmatprep.mubr.bf16.mxu0 %v235
        %628 = vmatmul.mubr.bf16.gmra.mrb[0].mxu0 %v234
        %v629 = vpop.f32.mrb[0].mxu0
        %v630 = vadd.f32 0.0, %v629
        %v631 = vpop.f32.mrb[0].mxu0
        %v632 = vadd.f32 0.0, %v631
        %v633 = vpop.f32.mrb[0].mxu0
        %v634 = vadd.f32 0.0, %v633
        %v635 = vpop.f32.mrb[0].mxu0
        %v636 = vadd.f32 0.0, %v635
        %637 = vdwg.mxu0
        %638 = vmatprep.subr.bf16.mxu0 %v462
        %639 = vmatpush1.bf16.msra.mxu0 %v461
        %640 = vmatprep.subr.bf16.mxu0 %v464
        %641 = vmatpush1.bf16.msra.mxu0 %v463
        %642 = vmatprep.subr.bf16.mxu0 %v466
        %643 = vmatpush1.bf16.msra.mxu0 %v465
        %644 = vmatprep.subr.bf16.mxu0 %v468
        %645 = vmatpush1.bf16.msra.mxu0 %v467
        %646 = vmatprep.subr.bf16.mxu0 %v470
        %647 = vmatpush1.bf16.msra.mxu0 %v469
        %648 = vmatprep.subr.bf16.mxu0 %v472
        %649 = vmatpush1.bf16.msra.mxu0 %v471
        %650 = vmatprep.subr.bf16.mxu0 %v474
        %651 = vmatpush1.bf16.msra.mxu0 %v473
        %652 = vmatprep.subr.bf16.mxu0 %v476
        %653 = vmatpush1.bf16.msra.mxu0 %v475
        %654 = vmatprep.subr.bf16.mxu0 0
        %655 = vmatpush1.bf16.msra.mxu0 0
        %656 = vmatprep.subr.bf16.mxu0 0
        %657 = vmatpush1.bf16.msra.mxu0 0
        %658 = vmatprep.subr.bf16.mxu0 0
        %659 = vmatpush1.bf16.msra.mxu0 0
        %660 = vmatprep.subr.bf16.mxu0 0
        %661 = vmatpush1.bf16.msra.mxu0 0
        %662 = vmatprep.subr.bf16.mxu0 0
        %663 = vmatpush1.bf16.msra.mxu0 0
        %664 = vmatprep.subr.bf16.mxu0 0
        %665 = vmatpush1.bf16.msra.mxu0 0
        %666 = vmatprep.subr.bf16.mxu0 0
        %667 = vmatpush1.bf16.msra.mxu0 0
        %668 = vmatprep.subr.bf16.mxu0 0
        %669 = vmatpush1.bf16.msra.mxu0 0
        %670 = vmatprep.mubr.bf16.mxu0 0
        %671 = vmatmul.mubr.bf16.gmra.mrb[0].mxu0 %v215
        %v672 = vpop.f32.mrb[0].mxu0
        %v673 = vadd.f32 %v560, %v672
        %v674 = vpop.f32.mrb[0].mxu0
        %v675 = vadd.f32 %v562, %v674
        %v676 = vpop.f32.mrb[0].mxu0
        %v677 = vadd.f32 %v564, %v676
        %v678 = vpop.f32.mrb[0].mxu0
        %v679 = vadd.f32 %v566, %v678
        %680 = vmatprep.mubr.bf16.mxu0 0
        %681 = vmatmul.mubr.bf16.gmra.mrb[0].mxu0 %v218
        %v682 = vpop.f32.mrb[0].mxu0
        %v683 = vadd.f32 %v570, %v682
        %v684 = vpop.f32.mrb[0].mxu0
        %v685 = vadd.f32 %v572, %v684
        %v686 = vpop.f32.mrb[0].mxu0
        %v687 = vadd.f32 %v574, %v686
        %v688 = vpop.f32.mrb[0].mxu0
        %v689 = vadd.f32 %v576, %v688
        %690 = vmatprep.mubr.bf16.mxu0 0
        %691 = vmatmul.mubr.bf16.gmra.mrb[0].mxu0 %v221
        %v692 = vpop.f32.mrb[0].mxu0
        %v693 = vadd.f32 %v580, %v692
        %v694 = vpop.f32.mrb[0].mxu0
        %v695 = vadd.f32 %v582, %v694
        %v696 = vpop.f32.mrb[0].mxu0
        %v697 = vadd.f32 %v584, %v696
        %v698 = vpop.f32.mrb[0].mxu0
        %v699 = vadd.f32 %v586, %v698
        %700 = vmatprep.mubr.bf16.mxu0 0
        %701 = vmatmul.mubr.bf16.gmra.mrb[0].mxu0 %v224
        %v702 = vpop.f32.mrb[0].mxu0
        %v703 = vadd.f32 %v590, %v702
        %v704 = vpop.f32.mrb[0].mxu0
        %v705 = vadd.f32 %v592, %v704
        %v706 = vpop.f32.mrb[0].mxu0
        %v707 = vadd.f32 %v594, %v706
        %v708 = vpop.f32.mrb[0].mxu0
        %v709 = vadd.f32 %v596, %v708
        %710 = vmatprep.mubr.bf16.mxu0 0
        %711 = vmatmul.mubr.bf16.gmra.mrb[0].mxu0 %v227
        %v712 = vpop.f32.mrb[0].mxu0
        %v713 = vadd.f32 %v600, %v712
        %v714 = vpop.f32.mrb[0].mxu0
        %v715 = vadd.f32 %v602, %v714
        %v716 = vpop.f32.mrb[0].mxu0
        %v717 = vadd.f32 %v604, %v716
        %v718 = vpop.f32.mrb[0].mxu0
        %v719 = vadd.f32 %v606, %v718
        %720 = vmatprep.mubr.bf16.mxu0 0
        %721 = vmatmul.mubr.bf16.gmra.mrb[0].mxu0 %v230
        %v722 = vpop.f32.mrb[0].mxu0
        %v723 = vadd.f32 %v610, %v722
        %v724 = vpop.f32.mrb[0].mxu0
        %v725 = vadd.f32 %v612, %v724
        %v726 = vpop.f32.mrb[0].mxu0
        %v727 = vadd.f32 %v614, %v726
        %v728 = vpop.f32.mrb[0].mxu0
        %v729 = vadd.f32 %v616, %v728
        %730 = vmatprep.mubr.bf16.mxu0 0
        %731 = vmatmul.mubr.bf16.gmra.mrb[0].mxu0 %v233
        %v732 = vpop.f32.mrb[0].mxu0
        %v733 = vadd.f32 %v620, %v732
        %v734 = vpop.f32.mrb[0].mxu0
        %v735 = vadd.f32 %v622, %v734
        %v736 = vpop.f32.mrb[0].mxu0
        %v737 = vadd.f32 %v624, %v736
        %v738 = vpop.f32.mrb[0].mxu0
        %v739 = vadd.f32 %v626, %v738
        %740 = vmatprep.mubr.bf16.mxu0 0
        %741 = vmatmul.mubr.bf16.gmra.mrb[0].mxu0 %v236
        %v742 = vpop.f32.mrb[0].mxu0
        %v743 = vadd.f32 %v630, %v742
        %v744 = vpop.f32.mrb[0].mxu0
        %v745 = vadd.f32 %v632, %v744
        %v746 = vpop.f32.mrb[0].mxu0
        %v747 = vadd.f32 %v634, %v746
        %v748 = vpop.f32.mrb[0].mxu0
        %v749 = vadd.f32 %v636, %v748
        %750 = vdwg.mxu0
        %v751 = vmul.f32 %v673, 0.125
        %v752 = vmul.f32 %v677, 0.125
        %v753 = vmul.f32 %v683, 0.125
        %v754 = vmul.f32 %v687, 0.125
        %v755 = vmul.f32 %v693, 0.125
        %v756 = vmul.f32 %v697, 0.125
        %v757 = vmul.f32 %v703, 0.125
        %v758 = vmul.f32 %v707, 0.125
        %v759 = vmul.f32 %v713, 0.125
        %v760 = vmul.f32 %v717, 0.125
        %v761 = vmul.f32 %v723, 0.125
        %v762 = vmul.f32 %v727, 0.125
        %v763 = vmul.f32 %v733, 0.125
        %v764 = vmul.f32 %v737, 0.125
        %v765 = vmul.f32 %v743, 0.125
        %v766 = vmul.f32 %v747, 0.125
        %v767 = vpack.c.bf16 %v752, %v751
        %v768 = vpack.c.bf16 %v754, %v753
        %v769 = vpack.c.bf16 %v756, %v755
        %v770 = vpack.c.bf16 %v758, %v757
        %v771 = vpack.c.bf16 %v760, %v759
        %v772 = vpack.c.bf16 %v762, %v761
        %v773 = vpack.c.bf16 %v764, %v763
        %v774 = vpack.c.bf16 %v766, %v765
        %v775 = vpack.c.bf16 %v677, %v673
        %v776 = vpack.c.bf16 %v687, %v683
        %v777 = vpack.c.bf16 %v697, %v693
        %v778 = vpack.c.bf16 %v707, %v703
        %v779 = vpack.c.bf16 %v717, %v713
        %v780 = vpack.c.bf16 %v727, %v723
        %v781 = vpack.c.bf16 %v737, %v733
        %v782 = vpack.c.bf16 %v747, %v743
        %791 = vrot.lane.b32.xlu0 %v775, 64
        %v792 = vpop.permute.xlu0 %791
        %793 = vrot.lane.b32.xlu0 %v776, 64
        %v794 = vpop.permute.xlu0 %793
        %795 = vrot.lane.b32.xlu0 %v777, 64
        %v796 = vpop.permute.xlu0 %795
        %797 = vrot.lane.b32.xlu0 %v778, 64
        %v798 = vpop.permute.xlu0 %797
        %799 = vrot.lane.b32.xlu0 %v779, 64
        %v800 = vpop.permute.xlu0 %799
        %801 = vrot.lane.b32.xlu0 %v780, 64
        %v802 = vpop.permute.xlu0 %801
        %803 = vrot.lane.b32.xlu0 %v781, 64
        %v804 = vpop.permute.xlu0 %803
        %805 = vrot.lane.b32.xlu0 %v782, 64
        %v806 = vpop.permute.xlu0 %805
        %vm807 = vcmask 523264
        %v809 = vsel %vm807, %v767, 0
        %v812 = vsel %vm807, %v768, 0
        %v815 = vsel %vm807, %v769, 0
        %v818 = vsel %vm807, %v770, 0
        %v821 = vsel %vm807, %v771, 0
        %v824 = vsel %vm807, %v772, 0
        %v827 = vsel %vm807, %v773, 0
        %v830 = vsel %vm807, %v774, 0
        %v833 = vsel %vm807, %v792, 0
        %v836 = vsel %vm807, %v794, 0
        %v839 = vsel %vm807, %v796, 0
        %v842 = vsel %vm807, %v798, 0
        %v845 = vsel %vm807, %v800, 0
        %v848 = vsel %vm807, %v802, 0
        %v851 = vsel %vm807, %v804, 0
        %v854 = vsel %vm807, %v806, 0
        %856 = vmatprep.subr.bf16.mxu0 0
        %857 = vmatpush1.bf16.xpose.msra.mxu0 %v833
        %858 = vmatprep.subr.bf16.mxu0 0
        %859 = vmatpush1.bf16.xpose.msra.mxu0 %v836
        %860 = vmatprep.subr.bf16.mxu0 0
        %861 = vmatpush1.bf16.xpose.msra.mxu0 %v839
        %862 = vmatprep.subr.bf16.mxu0 0
        %863 = vmatpush1.bf16.xpose.msra.mxu0 %v842
        %864 = vmatprep.subr.bf16.mxu0 0
        %865 = vmatpush1.bf16.xpose.msra.mxu0 %v845
        %866 = vmatprep.subr.bf16.mxu0 0
        %867 = vmatpush1.bf16.xpose.msra.mxu0 %v848
        %868 = vmatprep.subr.bf16.mxu0 0
        %869 = vmatpush1.bf16.xpose.msra.mxu0 %v851
        %870 = vmatprep.subr.bf16.mxu0 0
        %871 = vmatpush1.bf16.xpose.msra.mxu0 %v854
        %872 = vmatprep.subr.bf16.mxu0 0
        %873 = vmatpush1.bf16.xpose.msra.mxu0 0
        %874 = vmatprep.subr.bf16.mxu0 0
        %875 = vmatpush1.bf16.xpose.msra.mxu0 0
        %876 = vmatprep.subr.bf16.mxu0 0
        %877 = vmatpush1.bf16.xpose.msra.mxu0 0
        %878 = vmatprep.subr.bf16.mxu0 0
        %879 = vmatpush1.bf16.xpose.msra.mxu0 0
        %880 = vmatprep.subr.bf16.mxu0 0
        %881 = vmatpush1.bf16.xpose.msra.mxu0 0
        %882 = vmatprep.subr.bf16.mxu0 0
        %883 = vmatpush1.bf16.xpose.msra.mxu0 0
        %884 = vmatprep.subr.bf16.mxu0 0
        %885 = vmatpush1.bf16.xpose.msra.mxu0 0
        %886 = vmatprep.subr.bf16.mxu0 0
        %887 = vmatpush1.bf16.xpose.msra.mxu0 0
        %888 = vmatprep.mubr.bf16.mxu0 0
        %889 = vmatmul.mubr.bf16.gmra.mrb[0].mxu0 %v809
        %v890 = vpop.f32.mrb[0].mxu0
        %v891 = vadd.f32 0.0, %v890
        %v892 = vpop.f32.mrb[0].mxu0
        %v893 = vpop.f32.mrb[0].mxu0
        %v894 = vadd.f32 0.0, %v893
        %v895 = vpop.f32.mrb[0].mxu0
        %896 = vmatprep.mubr.bf16.mxu0 0
        %897 = vmatmul.mubr.bf16.gmra.mrb[0].mxu0 %v812
        %v898 = vpop.f32.mrb[0].mxu0
        %v899 = vadd.f32 0.0, %v898
        %v900 = vpop.f32.mrb[0].mxu0
        %v901 = vpop.f32.mrb[0].mxu0
        %v902 = vadd.f32 0.0, %v901
        %v903 = vpop.f32.mrb[0].mxu0
        %904 = vmatprep.mubr.bf16.mxu0 0
        %905 = vmatmul.mubr.bf16.gmra.mrb[0].mxu0 %v815
        %v906 = vpop.f32.mrb[0].mxu0
        %v907 = vadd.f32 0.0, %v906
        %v908 = vpop.f32.mrb[0].mxu0
        %v909 = vpop.f32.mrb[0].mxu0
        %v910 = vadd.f32 0.0, %v909
        %v911 = vpop.f32.mrb[0].mxu0
        %912 = vmatprep.mubr.bf16.mxu0 0
        %913 = vmatmul.mubr.bf16.gmra.mrb[0].mxu0 %v818
        %v914 = vpop.f32.mrb[0].mxu0
        %v915 = vadd.f32 0.0, %v914
        %v916 = vpop.f32.mrb[0].mxu0
        %v917 = vpop.f32.mrb[0].mxu0
        %v918 = vadd.f32 0.0, %v917
        %v919 = vpop.f32.mrb[0].mxu0
        %920 = vmatprep.mubr.bf16.mxu0 0
        %921 = vmatmul.mubr.bf16.gmra.mrb[0].mxu0 %v821
        %v922 = vpop.f32.mrb[0].mxu0
        %v923 = vadd.f32 0.0, %v922
        %v924 = vpop.f32.mrb[0].mxu0
        %v925 = vpop.f32.mrb[0].mxu0
        %v926 = vadd.f32 0.0, %v925
        %v927 = vpop.f32.mrb[0].mxu0
        %928 = vmatprep.mubr.bf16.mxu0 0
        %929 = vmatmul.mubr.bf16.gmra.mrb[0].mxu0 %v824
        %v930 = vpop.f32.mrb[0].mxu0
        %v931 = vadd.f32 0.0, %v930
        %v932 = vpop.f32.mrb[0].mxu0
        %v933 = vpop.f32.mrb[0].mxu0
        %v934 = vadd.f32 0.0, %v933
        %v935 = vpop.f32.mrb[0].mxu0
        %936 = vmatprep.mubr.bf16.mxu0 0
        %937 = vmatmul.mubr.bf16.gmra.mrb[0].mxu0 %v827
        %v938 = vpop.f32.mrb[0].mxu0
        %v939 = vadd.f32 0.0, %v938
        %v940 = vpop.f32.mrb[0].mxu0
        %v941 = vpop.f32.mrb[0].mxu0
        %v942 = vadd.f32 0.0, %v941
        %v943 = vpop.f32.mrb[0].mxu0
        %944 = vmatprep.mubr.bf16.mxu0 0
        %945 = vmatmul.mubr.bf16.gmra.mrb[0].mxu0 %v830
        %v946 = vpop.f32.mrb[0].mxu0
        %v947 = vadd.f32 0.0, %v946
        %v948 = vpop.f32.mrb[0].mxu0
        %v949 = vpop.f32.mrb[0].mxu0
        %v950 = vadd.f32 0.0, %v949
        %v951 = vpop.f32.mrb[0].mxu0
        %952 = vdwg.mxu0
        %v953 = vlaneseq
        %v954 = vshrl.u32 %v953, 7
        %v955 = vadd.s32 %v954, 8
        %v956 = vadd.s32 %v954, 16
        %v957 = vadd.s32 %v954, 24
        %v958 = vadd.s32 %v954, 32
        %v959 = vadd.s32 %v954, 40
        %v960 = vadd.s32 %v954, 48
        %v961 = vadd.s32 %v954, 56
        %v962 = vadd.s32 %v954, 64
        %v963 = vadd.s32 %v954, 72
        %v964 = vadd.s32 %v954, 80
        %v965 = vadd.s32 %v954, 88
        %v966 = vadd.s32 %v954, 96
        %v967 = vadd.s32 %v954, 104
        %v968 = vadd.s32 %v954, 112
        %v969 = vadd.s32 %v954, 120
        %v970 = vlaneseq
        %v971 = vand.u32 %v970, 127
        %vm972 = vcmp.le.s32.totalorder %v971, %v954
        %vm973 = vcmp.le.s32.totalorder %v971, %v955
        %vm974 = vcmp.le.s32.totalorder %v971, %v956
        %vm975 = vcmp.le.s32.totalorder %v971, %v957
        %vm976 = vcmp.le.s32.totalorder %v971, %v958
        %vm977 = vcmp.le.s32.totalorder %v971, %v959
        %vm978 = vcmp.le.s32.totalorder %v971, %v960
        %vm979 = vcmp.le.s32.totalorder %v971, %v961
        %vm980 = vcmp.le.s32.totalorder %v971, %v962
        %vm981 = vcmp.le.s32.totalorder %v971, %v963
        %vm982 = vcmp.le.s32.totalorder %v971, %v964
        %vm983 = vcmp.le.s32.totalorder %v971, %v965
        %vm984 = vcmp.le.s32.totalorder %v971, %v966
        %vm985 = vcmp.le.s32.totalorder %v971, %v967
        %vm986 = vcmp.le.s32.totalorder %v971, %v968
        %vm987 = vcmp.le.s32.totalorder %v971, %v969
        %v988 = vsel %vm972, %v891, -inf
        %v989 = vsel %vm973, %v894, -inf
        %v990 = vsel %vm974, %v899, -inf
        %v991 = vsel %vm975, %v902, -inf
        %v992 = vsel %vm976, %v907, -inf
        %v993 = vsel %vm977, %v910, -inf
        %v994 = vsel %vm978, %v915, -inf
        %v995 = vsel %vm979, %v918, -inf
        %v996 = vsel %vm980, %v923, -inf
        %v997 = vsel %vm981, %v926, -inf
        %v998 = vsel %vm982, %v931, -inf
        %v999 = vsel %vm983, %v934, -inf
        %v1000 = vsel %vm984, %v939, -inf
        %v1001 = vsel %vm985, %v942, -inf
        %v1002 = vsel %vm986, %v947, -inf
        %v1003 = vsel %vm987, %v950, -inf
        %1004 = vmax.xlane.f32.xlu0 %v988
        %v1005 = vpop.xlane.xlu0 %1004
        %1006 = vmax.xlane.f32.xlu0 %v989
        %v1007 = vpop.xlane.xlu0 %1006
        %1008 = vmax.xlane.f32.xlu0 %v990
        %v1009 = vpop.xlane.xlu0 %1008
        %1010 = vmax.xlane.f32.xlu0 %v991
        %v1011 = vpop.xlane.xlu0 %1010
        %1012 = vmax.xlane.f32.xlu0 %v992
        %v1013 = vpop.xlane.xlu0 %1012
        %1014 = vmax.xlane.f32.xlu0 %v993
        %v1015 = vpop.xlane.xlu0 %1014
        %1016 = vmax.xlane.f32.xlu0 %v994
        %v1017 = vpop.xlane.xlu0 %1016
        %1018 = vmax.xlane.f32.xlu0 %v995
        %v1019 = vpop.xlane.xlu0 %1018
        %1020 = vmax.xlane.f32.xlu0 %v996
        %v1021 = vpop.xlane.xlu0 %1020
        %1022 = vmax.xlane.f32.xlu0 %v997
        %v1023 = vpop.xlane.xlu0 %1022
        %1024 = vmax.xlane.f32.xlu0 %v998
        %v1025 = vpop.xlane.xlu0 %1024
        %1026 = vmax.xlane.f32.xlu0 %v999
        %v1027 = vpop.xlane.xlu0 %1026
        %1028 = vmax.xlane.f32.xlu0 %v1000
        %v1029 = vpop.xlane.xlu0 %1028
        %1030 = vmax.xlane.f32.xlu0 %v1001
        %v1031 = vpop.xlane.xlu0 %1030
        %1032 = vmax.xlane.f32.xlu0 %v1002
        %v1033 = vpop.xlane.xlu0 %1032
        %1034 = vmax.xlane.f32.xlu0 %v1003
        %v1035 = vpop.xlane.xlu0 %1034
        %v1036 = vsub.f32 %v988, %v1005
        %v1037 = vsub.f32 %v989, %v1007
        %v1038 = vsub.f32 %v990, %v1009
        %v1039 = vsub.f32 %v991, %v1011
        %v1040 = vsub.f32 %v992, %v1013
        %v1041 = vsub.f32 %v993, %v1015
        %v1042 = vsub.f32 %v994, %v1017
        %v1043 = vsub.f32 %v995, %v1019
        %v1044 = vsub.f32 %v996, %v1021
        %v1045 = vsub.f32 %v997, %v1023
        %v1046 = vsub.f32 %v998, %v1025
        %v1047 = vsub.f32 %v999, %v1027
        %v1048 = vsub.f32 %v1000, %v1029
        %v1049 = vsub.f32 %v1001, %v1031
        %v1050 = vsub.f32 %v1002, %v1033
        %v1051 = vsub.f32 %v1003, %v1035
        %v1052 = vmul.f32 %v1036, 1.442695
        %v1053 = vpow.pop %v1052
        %v1054 = vmul.f32 %v1037, 1.442695
        %v1055 = vpow.pop %v1054
        %v1056 = vmul.f32 %v1038, 1.442695
        %v1057 = vpow.pop %v1056
        %v1058 = vmul.f32 %v1039, 1.442695
        %v1059 = vpow.pop %v1058
        %v1060 = vmul.f32 %v1040, 1.442695
        %v1061 = vpow.pop %v1060
        %v1062 = vmul.f32 %v1041, 1.442695
        %v1063 = vpow.pop %v1062
        %v1064 = vmul.f32 %v1042, 1.442695
        %v1065 = vpow.pop %v1064
        %v1066 = vmul.f32 %v1043, 1.442695
        %v1067 = vpow.pop %v1066
        %v1068 = vmul.f32 %v1044, 1.442695
        %v1069 = vpow.pop %v1068
        %v1070 = vmul.f32 %v1045, 1.442695
        %v1071 = vpow.pop %v1070
        %v1072 = vmul.f32 %v1046, 1.442695
        %v1073 = vpow.pop %v1072
        %v1074 = vmul.f32 %v1047, 1.442695
        %v1075 = vpow.pop %v1074
        %v1076 = vmul.f32 %v1048, 1.442695
        %v1077 = vpow.pop %v1076
        %v1078 = vmul.f32 %v1049, 1.442695
        %v1079 = vpow.pop %v1078
        %v1080 = vmul.f32 %v1050, 1.442695
        %v1081 = vpow.pop %v1080
        %v1082 = vmul.f32 %v1051, 1.442695
        %v1083 = vpow.pop %v1082
        %1084 = vadd.xlane.f32.xlu0 %v1053
        %v1085 = vpop.xlane.xlu0 %1084
        %1086 = vadd.xlane.f32.xlu0 %v1055
        %v1087 = vpop.xlane.xlu0 %1086
        %1088 = vadd.xlane.f32.xlu0 %v1057
        %v1089 = vpop.xlane.xlu0 %1088
        %1090 = vadd.xlane.f32.xlu0 %v1059
        %v1091 = vpop.xlane.xlu0 %1090
        %1092 = vadd.xlane.f32.xlu0 %v1061
        %v1093 = vpop.xlane.xlu0 %1092
        %1094 = vadd.xlane.f32.xlu0 %v1063
        %v1095 = vpop.xlane.xlu0 %1094
        %1096 = vadd.xlane.f32.xlu0 %v1065
        %v1097 = vpop.xlane.xlu0 %1096
        %1098 = vadd.xlane.f32.xlu0 %v1067
        %v1099 = vpop.xlane.xlu0 %1098
        %1100 = vadd.xlane.f32.xlu0 %v1069
        %v1101 = vpop.xlane.xlu0 %1100
        %1102 = vadd.xlane.f32.xlu0 %v1071
        %v1103 = vpop.xlane.xlu0 %1102
        %1104 = vadd.xlane.f32.xlu0 %v1073
        %v1105 = vpop.xlane.xlu0 %1104
        %1106 = vadd.xlane.f32.xlu0 %v1075
        %v1107 = vpop.xlane.xlu0 %1106
        %1108 = vadd.xlane.f32.xlu0 %v1077
        %v1109 = vpop.xlane.xlu0 %1108
        %1110 = vadd.xlane.f32.xlu0 %v1079
        %v1111 = vpop.xlane.xlu0 %1110
        %1112 = vadd.xlane.f32.xlu0 %v1081
        %v1113 = vpop.xlane.xlu0 %1112
        %1114 = vadd.xlane.f32.xlu0 %v1083
        %v1115 = vpop.xlane.xlu0 %1114
        %v1116 = vrcp.pop %v1085
        %v1117 = vrcp.pop %v1087
        %v1118 = vrcp.pop %v1089
        %v1119 = vrcp.pop %v1091
        %v1120 = vrcp.pop %v1093
        %v1121 = vrcp.pop %v1095
        %v1122 = vrcp.pop %v1097
        %v1123 = vrcp.pop %v1099
        %v1124 = vrcp.pop %v1101
        %v1125 = vrcp.pop %v1103
        %v1126 = vrcp.pop %v1105
        %v1127 = vrcp.pop %v1107
        %v1128 = vrcp.pop %v1109
        %v1129 = vrcp.pop %v1111
        %v1130 = vrcp.pop %v1113
        %v1131 = vrcp.pop %v1115
        %v1132 = vmul.f32 %v1053, %v1116
        %v1133 = vmul.f32 %v1055, %v1117
        %v1134 = vmul.f32 %v1057, %v1118
        %v1135 = vmul.f32 %v1059, %v1119
        %v1136 = vmul.f32 %v1061, %v1120
        %v1137 = vmul.f32 %v1063, %v1121
        %v1138 = vmul.f32 %v1065, %v1122
        %v1139 = vmul.f32 %v1067, %v1123
        %v1140 = vmul.f32 %v1069, %v1124
        %v1141 = vmul.f32 %v1071, %v1125
        %v1142 = vmul.f32 %v1073, %v1126
        %v1143 = vmul.f32 %v1075, %v1127
        %v1144 = vmul.f32 %v1077, %v1128
        %v1145 = vmul.f32 %v1079, %v1129
        %v1146 = vmul.f32 %v1081, %v1130
        %v1147 = vmul.f32 %v1083, %v1131
        %v1148 = vpack.c.bf16 %v1133, %v1132
        %v1149 = vpack.c.bf16 %v1135, %v1134
        %v1150 = vpack.c.bf16 %v1137, %v1136
        %v1151 = vpack.c.bf16 %v1139, %v1138
        %v1152 = vpack.c.bf16 %v1141, %v1140
        %v1153 = vpack.c.bf16 %v1143, %v1142
        %v1154 = vpack.c.bf16 %v1145, %v1144
        %v1155 = vpack.c.bf16 %v1147, %v1146
        %v1156 = vpack.c.bf16 %v679, %v675
        %v1157 = vpack.c.bf16 %v689, %v685
        %v1158 = vpack.c.bf16 %v699, %v695
        %v1159 = vpack.c.bf16 %v709, %v705
        %v1160 = vpack.c.bf16 %v719, %v715
        %v1161 = vpack.c.bf16 %v729, %v725
        %v1162 = vpack.c.bf16 %v739, %v735
        %v1163 = vpack.c.bf16 %v749, %v745
        %1164 = vmatprep.subr.bf16.mxu0 0
        %1165 = vmatpush1.bf16.msra.mxu0 %v1156
        %1166 = vmatprep.subr.bf16.mxu0 0
        %1167 = vmatpush1.bf16.msra.mxu0 %v1157
        %1168 = vmatprep.subr.bf16.mxu0 0
        %1169 = vmatpush1.bf16.msra.mxu0 %v1158
        %1170 = vmatprep.subr.bf16.mxu0 0
        %1171 = vmatpush1.bf16.msra.mxu0 %v1159
        %1172 = vmatprep.subr.bf16.mxu0 0
        %1173 = vmatpush1.bf16.msra.mxu0 %v1160
        %1174 = vmatprep.subr.bf16.mxu0 0
        %1175 = vmatpush1.bf16.msra.mxu0 %v1161
        %1176 = vmatprep.subr.bf16.mxu0 0
        %1177 = vmatpush1.bf16.msra.mxu0 %v1162
        %1178 = vmatprep.subr.bf16.mxu0 0
        %1179 = vmatpush1.bf16.msra.mxu0 %v1163
        %1180 = vmatprep.subr.bf16.mxu0 0
        %1181 = vmatpush1.bf16.msra.mxu0 0
        %1182 = vmatprep.subr.bf16.mxu0 0
        %1183 = vmatpush1.bf16.msra.mxu0 0
        %1184 = vmatprep.subr.bf16.mxu0 0
        %1185 = vmatpush1.bf16.msra.mxu0 0
        %1186 = vmatprep.subr.bf16.mxu0 0
        %1187 = vmatpush1.bf16.msra.mxu0 0
        %1188 = vmatprep.subr.bf16.mxu0 0
        %1189 = vmatpush1.bf16.msra.mxu0 0
        %1190 = vmatprep.subr.bf16.mxu0 0
        %1191 = vmatpush1.bf16.msra.mxu0 0
        %1192 = vmatprep.subr.bf16.mxu0 0
        %1193 = vmatpush1.bf16.msra.mxu0 0
        %1194 = vmatprep.subr.bf16.mxu0 0
        %1195 = vmatpush1.bf16.msra.mxu0 0
        %1196 = vmatprep.mubr.bf16.mxu0 0
        %1197 = vmatmul.mubr.bf16.gmra.mrb[0].mxu0 %v1148
        %v1198 = vpop.f32.mrb[0].mxu0
        %v1199 = vadd.f32 0.0, %v1198
        %v1200 = vpop.f32.mrb[0].mxu0
        %v1201 = vpop.f32.mrb[0].mxu0
        %v1202 = vadd.f32 0.0, %v1201
        %v1203 = vpop.f32.mrb[0].mxu0
        %1204 = vmatprep.mubr.bf16.mxu0 0
        %1205 = vmatmul.mubr.bf16.gmra.mrb[0].mxu0 %v1149
        %v1206 = vpop.f32.mrb[0].mxu0
        %v1207 = vadd.f32 0.0, %v1206
        %v1208 = vpop.f32.mrb[0].mxu0
        %v1209 = vpop.f32.mrb[0].mxu0
        %v1210 = vadd.f32 0.0, %v1209
        %v1211 = vpop.f32.mrb[0].mxu0
        %1212 = vmatprep.mubr.bf16.mxu0 0
        %1213 = vmatmul.mubr.bf16.gmra.mrb[0].mxu0 %v1150
        %v1214 = vpop.f32.mrb[0].mxu0
        %v1215 = vadd.f32 0.0, %v1214
        %v1216 = vpop.f32.mrb[0].mxu0
        %v1217 = vpop.f32.mrb[0].mxu0
        %v1218 = vadd.f32 0.0, %v1217
        %v1219 = vpop.f32.mrb[0].mxu0
        %1220 = vmatprep.mubr.bf16.mxu0 0
        %1221 = vmatmul.mubr.bf16.gmra.mrb[0].mxu0 %v1151
        %v1222 = vpop.f32.mrb[0].mxu0
        %v1223 = vadd.f32 0.0, %v1222
        %v1224 = vpop.f32.mrb[0].mxu0
        %v1225 = vpop.f32.mrb[0].mxu0
        %v1226 = vadd.f32 0.0, %v1225
        %v1227 = vpop.f32.mrb[0].mxu0
        %1228 = vmatprep.mubr.bf16.mxu0 0
        %1229 = vmatmul.mubr.bf16.gmra.mrb[0].mxu0 %v1152
        %v1230 = vpop.f32.mrb[0].mxu0
        %v1231 = vadd.f32 0.0, %v1230
        %v1232 = vpop.f32.mrb[0].mxu0
        %v1233 = vpop.f32.mrb[0].mxu0
        %v1234 = vadd.f32 0.0, %v1233
        %v1235 = vpop.f32.mrb[0].mxu0
        %1236 = vmatprep.mubr.bf16.mxu0 0
        %1237 = vmatmul.mubr.bf16.gmra.mrb[0].mxu0 %v1153
        %v1238 = vpop.f32.mrb[0].mxu0
        %v1239 = vadd.f32 0.0, %v1238
        %v1240 = vpop.f32.mrb[0].mxu0
        %v1241 = vpop.f32.mrb[0].mxu0
        %v1242 = vadd.f32 0.0, %v1241
        %v1243 = vpop.f32.mrb[0].mxu0
        %1244 = vmatprep.mubr.bf16.mxu0 0
        %1245 = vmatmul.mubr.bf16.gmra.mrb[0].mxu0 %v1154
        %v1246 = vpop.f32.mrb[0].mxu0
        %v1247 = vadd.f32 0.0, %v1246
        %v1248 = vpop.f32.mrb[0].mxu0
        %v1249 = vpop.f32.mrb[0].mxu0
        %v1250 = vadd.f32 0.0, %v1249
        %v1251 = vpop.f32.mrb[0].mxu0
        %1252 = vmatprep.mubr.bf16.mxu0 0
        %1253 = vmatmul.mubr.bf16.gmra.mrb[0].mxu0 %v1155
        %v1254 = vpop.f32.mrb[0].mxu0
        %v1255 = vadd.f32 0.0, %v1254
        %v1256 = vpop.f32.mrb[0].mxu0
        %v1257 = vpop.f32.mrb[0].mxu0
        %v1258 = vadd.f32 0.0, %v1257
        %v1259 = vpop.f32.mrb[0].mxu0
        %1260 = vdwg.mxu0
        %1261 = vst.msk [vmem:[%s163] sm:$0xff] %vm807, %v1199
        %1262 = vst.msk [vmem:[%s163 + $0x8] sm:$0xff] %vm807, %v1202
        %1263 = vst.msk [vmem:[%s163 + $0x10] sm:$0xff] %vm807, %v1207
        %1264 = vst.msk [vmem:[%s163 + $0x18] sm:$0xff] %vm807, %v1210
        %1265 = vst.msk [vmem:[%s163 + $0x20] sm:$0xff] %vm807, %v1215
        %1266 = vst.msk [vmem:[%s163 + $0x28] sm:$0xff] %vm807, %v1218
        %1267 = vst.msk [vmem:[%s163 + $0x30] sm:$0xff] %vm807, %v1223
        %1268 = vst.msk [vmem:[%s163 + $0x38] sm:$0xff] %vm807, %v1226
        %1269 = vst.msk [vmem:[%s163 + $0x40] sm:$0xff] %vm807, %v1231
        %1270 = vst.msk [vmem:[%s163 + $0x48] sm:$0xff] %vm807, %v1234
        %1271 = vst.msk [vmem:[%s163 + $0x50] sm:$0xff] %vm807, %v1239
        %1272 = vst.msk [vmem:[%s163 + $0x58] sm:$0xff] %vm807, %v1242
        %1273 = vst.msk [vmem:[%s163 + $0x60] sm:$0xff] %vm807, %v1247
        %1274 = vst.msk [vmem:[%s163 + $0x68] sm:$0xff] %vm807, %v1250
        %1275 = vst.msk [vmem:[%s163 + $0x70] sm:$0xff] %vm807, %v1255
        %1276 = vst.msk [vmem:[%s163 + $0x78] sm:$0xff] %vm807, %v1258
        %p1277 = scmp.lt.s32.totalorder %s16, 1
        %s1278 = scalar_select %p1277, %s16, 1
        %s1279 = smul.addr %s1278, 16
        %s1280 = smul.addr %s1279, 8
        %s1281 = scalar_lea.vmem %s2, %s1280
        // Predicated region
        $region33: #{tpu_custom_call.1} parent=27 // pred_check
          %p1282 = pneg %p81
        $region34: #{tpu_custom_call.1} parent=27 // pred_check_branch
          %1284 = sbr.rel (%p1282) target = $region36
        $region35: #{tpu_custom_call.1} parent=27 // pred_region
          _
        $region36: #{tpu_custom_call.1} parent=27 // pred_fallthru
          _
      $region28: #{tpu_custom_call.1} parent=5 // pred_fallthru
        _
      %p1285 = scmp.le.s32.totalorder 2, %s11
      // Predicated region
      $region37: #{tpu_custom_call.1} parent=5 // pred_check
        %p1286 = pneg %p1285
      $region38: #{tpu_custom_call.1} parent=5 // pred_check_branch
        %1288 = sbr.rel (%p1286) target = $region40
      $region39: #{tpu_custom_call.1} parent=5 // pred_region
        %s1289 = ssub.s32 %s11, 2
        // Predicated region
        $region41: #{tpu_custom_call.1} parent=39 // pred_check
          %p1290 = pneg %p87
        $region42: #{tpu_custom_call.1} parent=39 // pred_check_branch
          %1292 = sbr.rel (%p1290) target = $region44
        $region43: #{tpu_custom_call.1} parent=39 // pred_region
          %p1293 = scmp.lt.s32.totalorder %s17, 1
          %s1294 = scalar_select %p1293, %s17, 1
          %s1295 = smul.addr %s1294, 16
          %s1296 = smul.addr %s1295, 8
          %s1297 = scalar_lea.vmem %s2, %s1296
        $region44: #{tpu_custom_call.1} parent=39 // pred_fallthru
          _
      $region40: #{tpu_custom_call.1} parent=5 // pred_fallthru
        _
    $region6: #{tpu_custom_call.1} parent=1 // loop_footer
      %s15 = sadd.s32 1, %s11
    $region7: #{tpu_custom_call.1} parent=1 // loop_footer_branch
      %10 = sbr.rel target = $region3
    $region8: #{tpu_custom_call.1} parent=1 // loop_exit
      _
    %1298 = vsyncpa [#allocation3], 1
    %s1299 = scalar_lea.sflag [#allocation3], 1
    %1300 = vsyncpa %s1299, 1

</llo_original>
